<compile_context>
chip_gen: v5e
topology: v5e:2x2
jax: 0.10.0
libtpu: 0.0.40
codegen_flags: <defaults>
</compile_context>

<pallas_src>
import jax
import jax.numpy as jnp
import numpy as np
from jax import lax
from jax.experimental import pallas as pl
from jax.experimental.pallas import tpu as pltpu


def _round_up(x, m):
    return (x + m - 1) // m * m


def pack_outer_pos_bow_weight(embed_weight, *, num_chars, embed_dim):
    """Pre-arrange the Linear weight as a zero-padded block-diagonal panel.

    Returns f32 [round_up(3*num_chars,128), round_up(embed_dim,128)]:
      rows [0,NC)/[NC,2NC)/[2NC,3NC) hold weight.T on the (first, bow, last)
      diagonal blocks; remaining rows are zero (dense K MXU feed).  Columns
      [0, dim_add) are zero (implements F.pad); columns >= embed_dim are zero
      (lane-dense output, sliced off by the wrapper).
    Pure function of the parameter: build once and reuse across calls.
    """
    d3 = embed_dim // 3
    dim_add = embed_dim % 3
    assert embed_weight.shape == (d3, num_chars)
    k_pad = _round_up(3 * num_chars, 128)
    n_pad = _round_up(embed_dim, 128)
    e = embed_weight.T.astype(jnp.float32)                       # [NC, D3]
    w = jnp.zeros((k_pad, n_pad), jnp.float32)
    w = w.at[0:num_chars, dim_add:dim_add + d3].set(e)
    w = w.at[num_chars:2 * num_chars, dim_add + d3:dim_add + 2 * d3].set(e)
    w = w.at[2 * num_chars:3 * num_chars, dim_add + 2 * d3:embed_dim].set(e)
    return w


def _make_kernel(num_chars, r_sub, n_sub):
    nc = num_chars

    def kernel(sntcs_ref, e_ref, out_ref):
        l = sntcs_ref.shape[1]
        k_pad = e_ref.shape[0]

        @pl.loop(0, n_sub)
        def _(i):
            start = pl.multiple_of(i * r_sub, r_sub)
            s = sntcs_ref[pl.ds(start, r_sub), :]                # [r, L] int32

            # wl = relu(argmax(s, -1) - 1), first-occurrence tie-break (torch).
            pos = lax.broadcasted_iota(jnp.int32, (r_sub, l), 1)
            mx = jnp.max(s, axis=1, keepdims=True)
            amax = jnp.min(jnp.where(s == mx, pos, l), axis=1, keepdims=True)
            wl = jnp.maximum(amax - 1, 0)                        # [r, 1]

            sel = pos == wl
            # gather char at wl (exactly one lane matches per row)
            ends = jnp.sum(jnp.where(sel, s, 0), axis=1, keepdims=True)
            # scatter 0 at wl; wl <= L-2 so the last slot is untouched here —
            # the overwrite of the last slot with `ends` is folded into the
            # "last" histogram section below.
            s_mod = jnp.where(sel, 0, s)

            # Shift char ids into padded-histogram classes:
            #   first -> [0,NC), bow -> [NC,2NC), last -> [2NC,3NC).
            # Out-of-range ids map to negatives so they never match the iota
            # (same drop behavior as one_hot(...)[..., :num_chars]).
            s_h = jnp.where((s_mod >= 0) & (s_mod < nc), s_mod, -1 - nc)
            e_h = jnp.where((ends >= 0) & (ends < nc), ends + 2 * nc, -1)

            cls = lax.broadcasted_iota(jnp.int32, (r_sub, k_pad), 1)
            hist = (s_h[:, 0:1] == cls).astype(jnp.float32)      # first char
            hist = hist + (e_h == cls).astype(jnp.float32)       # last slot = ends
            for p in range(1, l - 1):                            # bow positions
                hist = hist + ((s_h[:, p:p + 1] + nc) == cls).astype(jnp.float32)

            # Single dense-K MXU matmul emits the final padded, lane-dense slab
            # (F.pad and the concat are baked into the packed weight).
            out_ref[pl.ds(start, r_sub), :] = jnp.dot(
                hist, e_ref[...], preferred_element_type=jnp.float32)

    return kernel


def outer_pos_bow(sntcs, packed_weight, *, num_chars, embed_dim,
                  block_rows=2048, sub_rows=128):
    """sntcs: int [B, W, L]; packed_weight: from pack_outer_pos_bow_weight."""
    B, W, L = sntcs.shape
    k_pad = _round_up(3 * num_chars, 128)
    n_pad = _round_up(embed_dim, 128)
    assert packed_weight.shape == (k_pad, n_pad)

    rows = B * W
    # Row sub-chunk processed per inner-loop step (bounds vreg live ranges).
    r_sub = min(_round_up(sub_rows, 8), _round_up(rows, 8))
    # Rows per grid step: big enough to amortize the ~0.35us per-step cost,
    # small enough to leave >= 2 grid steps (v7x megacore) when rows allow.
    r_blk = max(r_sub, min(_round_up(block_rows, r_sub),
                           _round_up(pl.cdiv(rows, 2), r_sub)))
    rows_pad = _round_up(rows, r_blk)

    s_flat = sntcs.reshape(rows, L).astype(jnp.int32)
    if rows_pad != rows:
        s_flat = jnp.pad(s_flat, ((0, rows_pad - rows), (0, 0)))

    kernel = _make_kernel(num_chars, r_sub, r_blk // r_sub)
    out = pl.pallas_call(
        kernel,
        out_shape=jax.ShapeDtypeStruct((rows_pad, n_pad), jnp.float32),
        grid_spec=pltpu.PrefetchScalarGridSpec(
            num_scalar_prefetch=0,
            grid=(rows_pad // r_blk,),
            in_specs=[
                pl.BlockSpec((r_blk, L), lambda i: (i, 0)),
                pl.BlockSpec((k_pad, n_pad), lambda i: (0, 0)),
            ],
            out_specs=pl.BlockSpec((r_blk, n_pad), lambda i: (i, 0)),
        ),
        compiler_params=pltpu.CompilerParams(
            dimension_semantics=("parallel",)),
    )(s_flat, packed_weight)
    return out[:rows, :embed_dim].reshape(B, W, embed_dim)


def outer_pos_bow_ref(sntcs, embed_weight, *, num_chars, embed_dim):
    """Pure-JAX reference mirroring the PyTorch forward."""
    dim_add = embed_dim % 3
    L = sntcs.shape[2]
    wl = jnp.maximum(jnp.argmax(sntcs, axis=2) - 1, 0)                     # [B, W]
    ends = jnp.take_along_axis(sntcs, wl[..., None], axis=2)[..., 0]       # [B, W]
    pos = jnp.arange(L)[None, None, :]
    s = jnp.where(pos == wl[..., None], 0, sntcs)
    s = s.at[:, :, -1].set(ends)
    oh = jax.nn.one_hot(s, num_chars, dtype=jnp.float32)                   # [B,W,L,NC]
    emb = oh @ embed_weight.T.astype(jnp.float32)                          # [B,W,L,D3]
    bow = jnp.sum(emb[:, :, 1:-1], axis=2)
    x = jnp.concatenate([emb[:, :, 0], bow, emb[:, :, -1]], axis=2)
    return jnp.pad(x, ((0, 0), (0, 0), (dim_add, 0)))


if __name__ == "__main__":
    # Small shapes consistent with the module.
    B, W, L = 2, 8, 16          # batch, words per sentence, chars per word
    NUM_CHARS = 32              # alphabet size (one-hot width / Linear in_features)
    EMBED_DIM = 20              # -> D3 = 6, dim_add = 2

    key = jax.random.PRNGKey(0)
    k_data, k_w = jax.random.split(key)

    sntcs = jax.random.randint(k_data, (B, W, L), 0, NUM_CHARS, dtype=jnp.int32)
    sntcs = sntcs.at[0, 0, 3].set(NUM_CHARS - 1)

    d3 = EMBED_DIM // 3
    embed_weight = (jax.random.normal(k_w, (d3, NUM_CHARS), dtype=jnp.float32)
                    * (1.0 / np.sqrt(NUM_CHARS)))

    # Packed weight depends only on the parameter: build once, reuse everywhere.
    packed_w = pack_outer_pos_bow_weight(embed_weight, num_chars=NUM_CHARS,
                                         embed_dim=EMBED_DIM)

    out = jax.block_until_ready(
        outer_pos_bow(sntcs, packed_w, num_chars=NUM_CHARS, embed_dim=EMBED_DIM))
    ref = outer_pos_bow_ref(sntcs, embed_weight,
                            num_chars=NUM_CHARS, embed_dim=EMBED_DIM)
    np.testing.assert_allclose(np.asarray(out), np.asarray(ref),
                               rtol=1e-5, atol=1e-5)
    assert out.shape == (B, W, EMBED_DIM)

    # Second case: multi-step grid + in-kernel row sub-chunking + row padding
    # (600 rows -> r_sub=128, r_blk=384, rows_pad=768, grid=(2,)), plus one
    # out-of-range char id (dropped, matching one_hot[..., :num_chars]).
    B2, W2 = 3, 200
    s2 = jax.random.randint(jax.random.PRNGKey(1), (B2, W2, L), 0, NUM_CHARS,
                            dtype=jnp.int32)
    s2 = s2.at[0, 0, 5].set(NUM_CHARS + 3)
    out2 = jax.block_until_ready(
        outer_pos_bow(s2, packed_w, num_chars=NUM_CHARS, embed_dim=EMBED_DIM))
    ref2 = outer_pos_bow_ref(s2, embed_weight,
                             num_chars=NUM_CHARS, embed_dim=EMBED_DIM)
    np.testing.assert_allclose(np.asarray(out2), np.asarray(ref2),
                               rtol=1e-5, atol=1e-5)

    print("KERNEL_OK")
</pallas_src>

<mosaic_0001>
module attributes {stable_mosaic.version = 11 : i64} {
  func.func @kernel(%arg0: i32, %arg1: memref<16x16xi32, #tpu.memory_space<vmem>>, %arg2: memref<128x128xf32, #tpu.memory_space<vmem>>, %arg3: memref<16x128xf32, #tpu.memory_space<vmem>>) attributes {dimension_semantics = [#tpu.dimension_semantics<parallel>], iteration_bounds = array<i64: 1>, scalar_prefetch = 0 : i64, scratch_operands = 0 : i64, tpu.core_type = #tpu.core_type<tc>, window_params = [{transform_indices = @transform_0, window_bounds = array<i64: 16, 16>}, {pipeline_mode = #tpu.pipeline_mode<synchronous>, transform_indices = @transform_1, window_bounds = array<i64: 128, 128>}, {transform_indices = @transform_2, window_bounds = array<i64: 16, 128>}]} {
    %c0_i32 = arith.constant 0 : i32
    %c1_i32 = arith.constant 1 : i32
    %0 = arith.muli %c0_i32, %c1_i32 : i32
    %c0_i32_0 = arith.constant 0 : i32
    %1 = arith.addi %c0_i32_0, %0 : i32
    %c16_i32 = arith.constant 16 : i32
    %2 = arith.muli %1, %c16_i32 : i32
    %3 = tpu.assume_multiple %2, 16 : i32
    %4 = arith.index_cast %3 : i32 to index
    %c0 = arith.constant 0 : index
    %5 = vector.load %arg1[%4, %c0] : memref<16x16xi32, #tpu.memory_space<vmem>>, vector<16x16xi32>
    %6 = tpu.iota {dimensions = array<i32: 1>} : vector<16x16xi32>
    %cst = arith.constant dense<-2147483648> : vector<16xi32>
    %7 = vector.multi_reduction <maxsi>, %5, %cst [1] : vector<16x16xi32> to vector<16xi32>
    %8 = vector.shape_cast %7 : vector<16xi32> to vector<16x1xi32>
    %9 = vector.broadcast %8 : vector<16x1xi32> to vector<16x16xi32>
    %10 = arith.cmpi eq, %5, %9 : vector<16x16xi32>
    %c16_i32_1 = arith.constant 16 : i32
    %11 = vector.broadcast %c16_i32_1 : i32 to vector<16x16xi32>
    %12 = arith.select %10, %6, %11 : vector<16x16xi1>, vector<16x16xi32>
    %cst_2 = arith.constant dense<2147483647> : vector<16xi32>
    %13 = vector.multi_reduction <minsi>, %12, %cst_2 [1] : vector<16x16xi32> to vector<16xi32>
    %14 = vector.shape_cast %13 : vector<16xi32> to vector<16x1xi32>
    %c1_i32_3 = arith.constant 1 : i32
    %15 = vector.broadcast %c1_i32_3 : i32 to vector<16x1xi32>
    %16 = arith.subi %14, %15 : vector<16x1xi32>
    %c0_i32_4 = arith.constant 0 : i32
    %17 = vector.broadcast %c0_i32_4 : i32 to vector<16x1xi32>
    %18 = arith.maxsi %16, %17 : vector<16x1xi32>
    %19 = vector.broadcast %18 : vector<16x1xi32> to vector<16x16xi32>
    %20 = arith.cmpi eq, %6, %19 : vector<16x16xi32>
    %c0_i32_5 = arith.constant 0 : i32
    %21 = vector.broadcast %c0_i32_5 : i32 to vector<16x16xi32>
    %22 = arith.select %20, %5, %21 : vector<16x16xi1>, vector<16x16xi32>
    %cst_6 = arith.constant dense<0> : vector<16xi32>
    %23 = vector.multi_reduction <add>, %22, %cst_6 [1] : vector<16x16xi32> to vector<16xi32>
    %24 = vector.shape_cast %23 : vector<16xi32> to vector<16x1xi32>
    %c0_i32_7 = arith.constant 0 : i32
    %25 = vector.broadcast %c0_i32_7 : i32 to vector<16x16xi32>
    %26 = arith.select %20, %25, %5 : vector<16x16xi1>, vector<16x16xi32>
    %c0_i32_8 = arith.constant 0 : i32
    %27 = vector.broadcast %c0_i32_8 : i32 to vector<16x16xi32>
    %28 = arith.cmpi sge, %26, %27 : vector<16x16xi32>
    %c32_i32 = arith.constant 32 : i32
    %29 = vector.broadcast %c32_i32 : i32 to vector<16x16xi32>
    %30 = arith.cmpi slt, %26, %29 : vector<16x16xi32>
    %31 = arith.andi %28, %30 : vector<16x16xi1>
    %c-33_i32 = arith.constant -33 : i32
    %32 = vector.broadcast %c-33_i32 : i32 to vector<16x16xi32>
    %33 = arith.select %31, %26, %32 : vector<16x16xi1>, vector<16x16xi32>
    %c0_i32_9 = arith.constant 0 : i32
    %34 = vector.broadcast %c0_i32_9 : i32 to vector<16x1xi32>
    %35 = arith.cmpi sge, %24, %34 : vector<16x1xi32>
    %c32_i32_10 = arith.constant 32 : i32
    %36 = vector.broadcast %c32_i32_10 : i32 to vector<16x1xi32>
    %37 = arith.cmpi slt, %24, %36 : vector<16x1xi32>
    %38 = arith.andi %35, %37 : vector<16x1xi1>
    %c64_i32 = arith.constant 64 : i32
    %39 = vector.broadcast %c64_i32 : i32 to vector<16x1xi32>
    %40 = arith.addi %24, %39 : vector<16x1xi32>
    %c-1_i32 = arith.constant -1 : i32
    %41 = vector.broadcast %c-1_i32 : i32 to vector<16x1xi32>
    %42 = arith.select %38, %40, %41 : vector<16x1xi1>, vector<16x1xi32>
    %43 = tpu.iota {dimensions = array<i32: 1>} : vector<16x128xi32>
    %44 = vector.extract_strided_slice %33 {offsets = [0, 0], sizes = [16, 1], strides = [1, 1]} : vector<16x16xi32> to vector<16x1xi32>
    %45 = vector.broadcast %44 : vector<16x1xi32> to vector<16x128xi32>
    %46 = arith.cmpi eq, %45, %43 : vector<16x128xi32>
    %47 = arith.extui %46 : vector<16x128xi1> to vector<16x128xi32>
    %48 = arith.sitofp %47 : vector<16x128xi32> to vector<16x128xf32>
    %49 = vector.broadcast %42 : vector<16x1xi32> to vector<16x128xi32>
    %50 = arith.cmpi eq, %49, %43 : vector<16x128xi32>
    %51 = arith.extui %50 : vector<16x128xi1> to vector<16x128xi32>
    %52 = arith.sitofp %51 : vector<16x128xi32> to vector<16x128xf32>
    %53 = arith.addf %48, %52 : vector<16x128xf32>
    %54 = vector.extract_strided_slice %33 {offsets = [0, 1], sizes = [16, 1], strides = [1, 1]} : vector<16x16xi32> to vector<16x1xi32>
    %c32_i32_11 = arith.constant 32 : i32
    %55 = vector.broadcast %c32_i32_11 : i32 to vector<16x1xi32>
    %56 = arith.addi %54, %55 : vector<16x1xi32>
    %57 = vector.broadcast %56 : vector<16x1xi32> to vector<16x128xi32>
    %58 = arith.cmpi eq, %57, %43 : vector<16x128xi32>
    %59 = arith.extui %58 : vector<16x128xi1> to vector<16x128xi32>
    %60 = arith.sitofp %59 : vector<16x128xi32> to vector<16x128xf32>
    %61 = arith.addf %53, %60 : vector<16x128xf32>
    %62 = vector.extract_strided_slice %33 {offsets = [0, 2], sizes = [16, 1], strides = [1, 1]} : vector<16x16xi32> to vector<16x1xi32>
    %c32_i32_12 = arith.constant 32 : i32
    %63 = vector.broadcast %c32_i32_12 : i32 to vector<16x1xi32>
    %64 = arith.addi %62, %63 : vector<16x1xi32>
    %65 = vector.broadcast %64 : vector<16x1xi32> to vector<16x128xi32>
    %66 = arith.cmpi eq, %65, %43 : vector<16x128xi32>
    %67 = arith.extui %66 : vector<16x128xi1> to vector<16x128xi32>
    %68 = arith.sitofp %67 : vector<16x128xi32> to vector<16x128xf32>
    %69 = arith.addf %61, %68 : vector<16x128xf32>
    %70 = vector.extract_strided_slice %33 {offsets = [0, 3], sizes = [16, 1], strides = [1, 1]} : vector<16x16xi32> to vector<16x1xi32>
    %c32_i32_13 = arith.constant 32 : i32
    %71 = vector.broadcast %c32_i32_13 : i32 to vector<16x1xi32>
    %72 = arith.addi %70, %71 : vector<16x1xi32>
    %73 = vector.broadcast %72 : vector<16x1xi32> to vector<16x128xi32>
    %74 = arith.cmpi eq, %73, %43 : vector<16x128xi32>
    %75 = arith.extui %74 : vector<16x128xi1> to vector<16x128xi32>
    %76 = arith.sitofp %75 : vector<16x128xi32> to vector<16x128xf32>
    %77 = arith.addf %69, %76 : vector<16x128xf32>
    %78 = vector.extract_strided_slice %33 {offsets = [0, 4], sizes = [16, 1], strides = [1, 1]} : vector<16x16xi32> to vector<16x1xi32>
    %c32_i32_14 = arith.constant 32 : i32
    %79 = vector.broadcast %c32_i32_14 : i32 to vector<16x1xi32>
    %80 = arith.addi %78, %79 : vector<16x1xi32>
    %81 = vector.broadcast %80 : vector<16x1xi32> to vector<16x128xi32>
    %82 = arith.cmpi eq, %81, %43 : vector<16x128xi32>
    %83 = arith.extui %82 : vector<16x128xi1> to vector<16x128xi32>
    %84 = arith.sitofp %83 : vector<16x128xi32> to vector<16x128xf32>
    %85 = arith.addf %77, %84 : vector<16x128xf32>
    %86 = vector.extract_strided_slice %33 {offsets = [0, 5], sizes = [16, 1], strides = [1, 1]} : vector<16x16xi32> to vector<16x1xi32>
    %c32_i32_15 = arith.constant 32 : i32
    %87 = vector.broadcast %c32_i32_15 : i32 to vector<16x1xi32>
    %88 = arith.addi %86, %87 : vector<16x1xi32>
    %89 = vector.broadcast %88 : vector<16x1xi32> to vector<16x128xi32>
    %90 = arith.cmpi eq, %89, %43 : vector<16x128xi32>
    %91 = arith.extui %90 : vector<16x128xi1> to vector<16x128xi32>
    %92 = arith.sitofp %91 : vector<16x128xi32> to vector<16x128xf32>
    %93 = arith.addf %85, %92 : vector<16x128xf32>
    %94 = vector.extract_strided_slice %33 {offsets = [0, 6], sizes = [16, 1], strides = [1, 1]} : vector<16x16xi32> to vector<16x1xi32>
    %c32_i32_16 = arith.constant 32 : i32
    %95 = vector.broadcast %c32_i32_16 : i32 to vector<16x1xi32>
    %96 = arith.addi %94, %95 : vector<16x1xi32>
    %97 = vector.broadcast %96 : vector<16x1xi32> to vector<16x128xi32>
    %98 = arith.cmpi eq, %97, %43 : vector<16x128xi32>
    %99 = arith.extui %98 : vector<16x128xi1> to vector<16x128xi32>
    %100 = arith.sitofp %99 : vector<16x128xi32> to vector<16x128xf32>
    %101 = arith.addf %93, %100 : vector<16x128xf32>
    %102 = vector.extract_strided_slice %33 {offsets = [0, 7], sizes = [16, 1], strides = [1, 1]} : vector<16x16xi32> to vector<16x1xi32>
    %c32_i32_17 = arith.constant 32 : i32
    %103 = vector.broadcast %c32_i32_17 : i32 to vector<16x1xi32>
    %104 = arith.addi %102, %103 : vector<16x1xi32>
    %105 = vector.broadcast %104 : vector<16x1xi32> to vector<16x128xi32>
    %106 = arith.cmpi eq, %105, %43 : vector<16x128xi32>
    %107 = arith.extui %106 : vector<16x128xi1> to vector<16x128xi32>
    %108 = arith.sitofp %107 : vector<16x128xi32> to vector<16x128xf32>
    %109 = arith.addf %101, %108 : vector<16x128xf32>
    %110 = vector.extract_strided_slice %33 {offsets = [0, 8], sizes = [16, 1], strides = [1, 1]} : vector<16x16xi32> to vector<16x1xi32>
    %c32_i32_18 = arith.constant 32 : i32
    %111 = vector.broadcast %c32_i32_18 : i32 to vector<16x1xi32>
    %112 = arith.addi %110, %111 : vector<16x1xi32>
    %113 = vector.broadcast %112 : vector<16x1xi32> to vector<16x128xi32>
    %114 = arith.cmpi eq, %113, %43 : vector<16x128xi32>
    %115 = arith.extui %114 : vector<16x128xi1> to vector<16x128xi32>
    %116 = arith.sitofp %115 : vector<16x128xi32> to vector<16x128xf32>
    %117 = arith.addf %109, %116 : vector<16x128xf32>
    %118 = vector.extract_strided_slice %33 {offsets = [0, 9], sizes = [16, 1], strides = [1, 1]} : vector<16x16xi32> to vector<16x1xi32>
    %c32_i32_19 = arith.constant 32 : i32
    %119 = vector.broadcast %c32_i32_19 : i32 to vector<16x1xi32>
    %120 = arith.addi %118, %119 : vector<16x1xi32>
    %121 = vector.broadcast %120 : vector<16x1xi32> to vector<16x128xi32>
    %122 = arith.cmpi eq, %121, %43 : vector<16x128xi32>
    %123 = arith.extui %122 : vector<16x128xi1> to vector<16x128xi32>
    %124 = arith.sitofp %123 : vector<16x128xi32> to vector<16x128xf32>
    %125 = arith.addf %117, %124 : vector<16x128xf32>
    %126 = vector.extract_strided_slice %33 {offsets = [0, 10], sizes = [16, 1], strides = [1, 1]} : vector<16x16xi32> to vector<16x1xi32>
    %c32_i32_20 = arith.constant 32 : i32
    %127 = vector.broadcast %c32_i32_20 : i32 to vector<16x1xi32>
    %128 = arith.addi %126, %127 : vector<16x1xi32>
    %129 = vector.broadcast %128 : vector<16x1xi32> to vector<16x128xi32>
    %130 = arith.cmpi eq, %129, %43 : vector<16x128xi32>
    %131 = arith.extui %130 : vector<16x128xi1> to vector<16x128xi32>
    %132 = arith.sitofp %131 : vector<16x128xi32> to vector<16x128xf32>
    %133 = arith.addf %125, %132 : vector<16x128xf32>
    %134 = vector.extract_strided_slice %33 {offsets = [0, 11], sizes = [16, 1], strides = [1, 1]} : vector<16x16xi32> to vector<16x1xi32>
    %c32_i32_21 = arith.constant 32 : i32
    %135 = vector.broadcast %c32_i32_21 : i32 to vector<16x1xi32>
    %136 = arith.addi %134, %135 : vector<16x1xi32>
    %137 = vector.broadcast %136 : vector<16x1xi32> to vector<16x128xi32>
    %138 = arith.cmpi eq, %137, %43 : vector<16x128xi32>
    %139 = arith.extui %138 : vector<16x128xi1> to vector<16x128xi32>
    %140 = arith.sitofp %139 : vector<16x128xi32> to vector<16x128xf32>
    %141 = arith.addf %133, %140 : vector<16x128xf32>
    %142 = vector.extract_strided_slice %33 {offsets = [0, 12], sizes = [16, 1], strides = [1, 1]} : vector<16x16xi32> to vector<16x1xi32>
    %c32_i32_22 = arith.constant 32 : i32
    %143 = vector.broadcast %c32_i32_22 : i32 to vector<16x1xi32>
    %144 = arith.addi %142, %143 : vector<16x1xi32>
    %145 = vector.broadcast %144 : vector<16x1xi32> to vector<16x128xi32>
    %146 = arith.cmpi eq, %145, %43 : vector<16x128xi32>
    %147 = arith.extui %146 : vector<16x128xi1> to vector<16x128xi32>
    %148 = arith.sitofp %147 : vector<16x128xi32> to vector<16x128xf32>
    %149 = arith.addf %141, %148 : vector<16x128xf32>
    %150 = vector.extract_strided_slice %33 {offsets = [0, 13], sizes = [16, 1], strides = [1, 1]} : vector<16x16xi32> to vector<16x1xi32>
    %c32_i32_23 = arith.constant 32 : i32
    %151 = vector.broadcast %c32_i32_23 : i32 to vector<16x1xi32>
    %152 = arith.addi %150, %151 : vector<16x1xi32>
    %153 = vector.broadcast %152 : vector<16x1xi32> to vector<16x128xi32>
    %154 = arith.cmpi eq, %153, %43 : vector<16x128xi32>
    %155 = arith.extui %154 : vector<16x128xi1> to vector<16x128xi32>
    %156 = arith.sitofp %155 : vector<16x128xi32> to vector<16x128xf32>
    %157 = arith.addf %149, %156 : vector<16x128xf32>
    %158 = vector.extract_strided_slice %33 {offsets = [0, 14], sizes = [16, 1], strides = [1, 1]} : vector<16x16xi32> to vector<16x1xi32>
    %c32_i32_24 = arith.constant 32 : i32
    %159 = vector.broadcast %c32_i32_24 : i32 to vector<16x1xi32>
    %160 = arith.addi %158, %159 : vector<16x1xi32>
    %161 = vector.broadcast %160 : vector<16x1xi32> to vector<16x128xi32>
    %162 = arith.cmpi eq, %161, %43 : vector<16x128xi32>
    %163 = arith.extui %162 : vector<16x128xi1> to vector<16x128xi32>
    %164 = arith.sitofp %163 : vector<16x128xi32> to vector<16x128xf32>
    %165 = arith.addf %157, %164 : vector<16x128xf32>
    %c0_25 = arith.constant 0 : index
    %c0_26 = arith.constant 0 : index
    %166 = vector.load %arg2[%c0_25, %c0_26] : memref<128x128xf32, #tpu.memory_space<vmem>>, vector<128x128xf32>
    %cst_27 = arith.constant dense<0.000000e+00> : vector<16x128xf32>
    %167 = tpu.matmul %165, %166, %cst_27 {dimension_numbers = #tpu.dot_dimension_numbers<[1], [0], [0], [1], [0, 0, 1, 1], [], []>} : vector<16x128xf32>, vector<128x128xf32>, vector<16x128xf32> -> vector<16x128xf32>
    %168 = arith.index_cast %3 : i32 to index
    %c0_28 = arith.constant 0 : index
    %169 = vector.load %arg3[%168, %c0_28] : memref<16x128xf32, #tpu.memory_space<vmem>>, vector<16x128xf32>
    tpu.vector_store %arg3[%168, %c0_28], %167 {strides = array<i32>} : memref<16x128xf32, #tpu.memory_space<vmem>>, vector<16x128xf32>,
    %c1_i32_29 = arith.constant 1 : i32
    return
  }
  func.func @transform_0(%arg0: i32) -> (i32, i32) {
    %c0_i32 = arith.constant 0 : i32
    %c0_i32_0 = arith.constant 0 : i32
    return %arg0, %c0_i32 : i32, i32
  }
  func.func @transform_1(%arg0: i32) -> (i32, i32) {
    %c0_i32 = arith.constant 0 : i32
    %c0_i32_0 = arith.constant 0 : i32
    %c0_i32_1 = arith.constant 0 : i32
    return %c0_i32, %c0_i32_0 : i32, i32
  }
  func.func @transform_2(%arg0: i32) -> (i32, i32) {
    %c0_i32 = arith.constant 0 : i32
    %c0_i32_0 = arith.constant 0 : i32
    return %arg0, %c0_i32 : i32, i32
  }
}

</mosaic_0001>

<llo_original>
// kernel: tpu_custom_call.1
$region0: #{tpu_custom_call.1}
  #allocation0 [shape = 'u32[]', space=smem, size = 0x4, offset = 0x4, fixed_abs, tag = 'smem constant byte address 0x4 - core index']
  #allocation1 [shape = 'u32[72,128]{1,0:T(1,128)}', space=vmem, size = 0x9000, scoped, tag = 'internal scratch']
  %s0 = inlined_call_operand.hbm [shape: s32[16,16], index: 0, kind: input, shape index: {}]
  %s1 = inlined_call_operand.hbm [shape: f32[128,128], index: 1, kind: input, shape index: {}]
  %s2 = inlined_call_operand.hbm [shape: f32[16,128], index: 2, kind: output, shape index: {}]
  %s3 = sld [smem:[#allocation0]]
  $region26: #{tpu_custom_call.1} parent=0
    _
  %s5 = ssub.s32 1, %s3
  %s6 = scalar_select 0, %s5, %s3
  $region1: #{tpu_custom_call.1} parent=0
    #allocation2 [shape = 'u8[8192]{0}', space=vmem, size = 0x2000, scoped, tag = 'input window, operand 0, single buffered']
    #allocation3 [shape = 's32[1]{0}', space=sflag, size = 0x4, scoped, tag = 'scoped memory for tpu_custom_call.1']
    #allocation4 [shape = 's32[1]{0}', space=sflag, size = 0x4, scoped, tag = 'scoped memory for tpu_custom_call.1']
    #allocation5 [shape = 'u8[65536]{0}', space=vmem, size = 0x10000, scoped, tag = 'input window, operand 1, single buffered']
    #allocation6 [shape = 's32[1]{0}', space=sflag, size = 0x4, scoped, tag = 'scoped memory for tpu_custom_call.1']
    #allocation7 [shape = 'u8[8192]{0}', space=vmem, size = 0x2000, scoped, tag = 'output window, operand 0, single buffered']
    %7 = vsyncpa [#allocation3], 0
    %8 = vsyncpa [#allocation6], 0
    %9 = vsyncpa [#allocation4], 0
    // Predicated region
    $region2: #{tpu_custom_call.1} parent=1 // pred_check
      _
    $region3: #{tpu_custom_call.1} parent=1 // pred_check_branch
      %11 = sbr.rel (0) target = $region5
    $region4: #{tpu_custom_call.1} parent=1 // pred_region
      %13 = vsyncadd [#allocation3], 0
      %s14 = sshll.u32 %s0, 4
      %s15 = int_to_ptr.hbm [resolvable:$true] %s14
      %s16 = sshll.u32 [#allocation2], 4
      %s17 = int_to_ptr.vmem [resolvable:$true] %s16
      %22 = dma.hbm_to_vmem [thread:$0]  %s15, 256, %s17, [#allocation3], 128, 128, 8
    $region5: #{tpu_custom_call.1} parent=1 // pred_fallthru
      _
    // Predicated region
    $region6: #{tpu_custom_call.1} parent=1 // pred_check
      _
    $region7: #{tpu_custom_call.1} parent=1 // pred_check_branch
      %24 = sbr.rel (0) target = $region9
    $region8: #{tpu_custom_call.1} parent=1 // pred_region
      %26 = vsyncadd [#allocation6], 0
      %s27 = sshll.u32 %s1, 4
      %s28 = int_to_ptr.hbm [resolvable:$true] %s27
      %s29 = sshll.u32 [#allocation5], 4
      %s30 = int_to_ptr.vmem [resolvable:$true] %s29
      %35 = dma.hbm_to_vmem [thread:$0]  %s28, 2048, %s30, [#allocation6], 128, 128, 8
    $region9: #{tpu_custom_call.1} parent=1 // pred_fallthru
      _
    // Predicated region
    $region10: #{tpu_custom_call.1} parent=1 // pred_check
      _
    $region11: #{tpu_custom_call.1} parent=1 // pred_check_branch
      %37 = sbr.rel (0) target = $region13
    $region12: #{tpu_custom_call.1} parent=1 // pred_region
      %39 = dma.done [#allocation3], 256
    $region13: #{tpu_custom_call.1} parent=1 // pred_fallthru
      _
    // Predicated region
    $region14: #{tpu_custom_call.1} parent=1 // pred_check
      _
    $region15: #{tpu_custom_call.1} parent=1 // pred_check_branch
      %41 = sbr.rel (0) target = $region17
    $region16: #{tpu_custom_call.1} parent=1 // pred_region
      %43 = dma.done [#allocation6], 2048
    $region17: #{tpu_custom_call.1} parent=1 // pred_fallthru
      _
    %v44 = vld [vmem:[#allocation2] sm:$0xff]
    %v45 = vld [vmem:[#allocation2 + $0x8] sm:$0xff]
    %v46 = vlaneseq
    %v47 = vand.u32 %v46, 127
    %vm48 = vcmask 130048
    %v49 = vsel %vm48, %v44, 2147483648
    %v50 = vand.u32 %v49, 65535
    %v51 = vshra.s32 %v49, 16
    %v52 = vcvt.s32.f32 %v50
    %v53 = vcvt.s32.f32 %v51
    %54 = vmax.xlane.f32.xlu0 %v53
    %v55 = vpop.xlane.xlu0 %54
    %vm56 = vcmp.eq.f32.partialorder %v53, %v55
    %v57 = vsel %vm56, %v52, -inf
    %58 = vmax.xlane.f32.xlu0 %v57
    %v59 = vpop.xlane.xlu0 %58
    %v60 = vcvt.f32.s32 %v59
    %v61 = vcvt.f32.s32 %v55
    %v62 = vshll.u32 %v61, 16
    %v63 = vadd.s32 %v62, %v60
    %v64 = vsel %vm48, %v45, 2147483648
    %v65 = vand.u32 %v64, 65535
    %v66 = vshra.s32 %v64, 16
    %v67 = vcvt.s32.f32 %v65
    %v68 = vcvt.s32.f32 %v66
    %69 = vmax.xlane.f32.xlu0 %v68
    %v70 = vpop.xlane.xlu0 %69
    %vm71 = vcmp.eq.f32.partialorder %v68, %v70
    %v72 = vsel %vm71, %v67, -inf
    %73 = vmax.xlane.f32.xlu0 %v72
    %v74 = vpop.xlane.xlu0 %73
    %v75 = vcvt.f32.s32 %v74
    %v76 = vcvt.f32.s32 %v70
    %v77 = vshll.u32 %v76, 16
    %v78 = vadd.s32 %v77, %v75
    %vm79 = vcmp.eq.s32.totalorder %v44, %v63
    %vm80 = vcmp.eq.s32.totalorder %v45, %v78
    %v81 = vsel %vm79, %v47, 16
    %v82 = vsel %vm80, %v47, 16
    %v83 = vsel %vm48, %v81, 2147483647
    %v84 = vand.u32 %v83, 65535
    %v85 = vshra.s32 %v83, 16
    %v86 = vcvt.s32.f32 %v84
    %v87 = vcvt.s32.f32 %v85
    %88 = vmin.xlane.f32.xlu0 %v87
    %v89 = vpop.xlane.xlu0 %88
    %vm90 = vcmp.eq.f32.partialorder %v87, %v89
    %v91 = vsel %vm90, %v86, inf
    %92 = vmin.xlane.f32.xlu0 %v91
    %v93 = vpop.xlane.xlu0 %92
    %v94 = vcvt.f32.s32 %v93
    %v95 = vcvt.f32.s32 %v89
    %v96 = vshll.u32 %v95, 16
    %v97 = vadd.s32 %v96, %v94
    %v98 = vsel %vm48, %v82, 2147483647
    %v99 = vand.u32 %v98, 65535
    %v100 = vshra.s32 %v98, 16
    %v101 = vcvt.s32.f32 %v99
    %v102 = vcvt.s32.f32 %v100
    %103 = vmin.xlane.f32.xlu0 %v102
    %v104 = vpop.xlane.xlu0 %103
    %vm105 = vcmp.eq.f32.partialorder %v102, %v104
    %v106 = vsel %vm105, %v101, inf
    %107 = vmin.xlane.f32.xlu0 %v106
    %v108 = vpop.xlane.xlu0 %107
    %v109 = vcvt.f32.s32 %v108
    %v110 = vcvt.f32.s32 %v104
    %v111 = vshll.u32 %v110, 16
    %v112 = vadd.s32 %v111, %v109
    %v113 = vsub.s32 %v97, 1
    %v114 = vsub.s32 %v112, 1
    %vm115 = vcmp.gt.s32.totalorder %v113, 0
    %v116 = vsel %vm115, %v113, 0
    %vm117 = vcmp.gt.s32.totalorder %v114, 0
    %v118 = vsel %vm117, %v114, 0
    %vm119 = vcmp.eq.s32.totalorder %v47, %v116
    %vm120 = vcmp.eq.s32.totalorder %v47, %v118
    %v121 = vsel %vm119, %v44, 0
    %v122 = vsel %vm120, %v45, 0
    %v123 = vsel %vm48, %v121, 0
    %v124 = vand.u32 %v123, 65535
    %v125 = vshrl.u32 %v123, 16
    %v126 = vcvt.s32.f32 %v124
    %v127 = vcvt.s32.f32 %v125
    %128 = vadd.xlane.f32.xlu0 %v126
    %v129 = vpop.xlane.xlu0 %128
    %130 = vadd.xlane.f32.xlu0 %v127
    %v131 = vpop.xlane.xlu0 %130
    %v132 = vcvt.f32.s32 %v129
    %v133 = vcvt.f32.s32 %v131
    %v134 = vshll.u32 %v133, 16
    %v135 = vadd.s32 %v134, %v132
    %v136 = vsel %vm48, %v122, 0
    %v137 = vand.u32 %v136, 65535
    %v138 = vshrl.u32 %v136, 16
    %v139 = vcvt.s32.f32 %v137
    %v140 = vcvt.s32.f32 %v138
    %141 = vadd.xlane.f32.xlu0 %v139
    %v142 = vpop.xlane.xlu0 %141
    %143 = vadd.xlane.f32.xlu0 %v140
    %v144 = vpop.xlane.xlu0 %143
    %v145 = vcvt.f32.s32 %v142
    %v146 = vcvt.f32.s32 %v144
    %v147 = vshll.u32 %v146, 16
    %v148 = vadd.s32 %v147, %v145
    %v149 = vsel %vm119, 0, %v44
    %v150 = vsel %vm120, 0, %v45
    %vm151 = vcmp.ge.s32.totalorder %v149, 0
    %vm152 = vcmp.ge.s32.totalorder %v150, 0
    %vm153 = vcmp.lt.s32.totalorder %v149, 32
    %vm154 = vcmp.lt.s32.totalorder %v150, 32
    %vm155 = vmand %vm151, %vm153
    %vm156 = vmand %vm152, %vm154
    %v157 = vsel %vm155, %v149, 4294967263
    %v158 = vsel %vm156, %v150, 4294967263
    %vm159 = vcmp.ge.s32.totalorder %v135, 0
    %vm160 = vcmp.ge.s32.totalorder %v148, 0
    %vm161 = vcmp.lt.s32.totalorder %v135, 32
    %vm162 = vcmp.lt.s32.totalorder %v148, 32
    %vm163 = vmand %vm159, %vm161
    %vm164 = vmand %vm160, %vm162
    %v165 = vadd.s32 %v135, 64
    %v166 = vadd.s32 %v148, 64
    %v167 = vsel %vm163, %v165, 4294967295
    %v168 = vsel %vm164, %v166, 4294967295
    %169 = vset.pattern.permute.xlu0 0
    %170 = vperm.xlu0 %169, %v157
    %v171 = vpop.permute.xlu0 %170
    %172 = vset.pattern.permute.xlu0 0
    %173 = vperm.xlu0 %172, %v158
    %v174 = vpop.permute.xlu0 %173
    %vm175 = vcmp.eq.s32.totalorder %v171, %v47
    %vm176 = vcmp.eq.s32.totalorder %v174, %v47
    %v177 = vsel %vm175, 1, 0
    %v178 = vsel %vm176, 1, 0
    %v179 = vcvt.s32.f32 %v177
    %v180 = vcvt.s32.f32 %v178
    %vm181 = vcmp.eq.s32.totalorder %v167, %v47
    %vm182 = vcmp.eq.s32.totalorder %v168, %v47
    %v183 = vsel %vm181, 1, 0
    %v184 = vsel %vm182, 1, 0
    %v185 = vcvt.s32.f32 %v183
    %v186 = vcvt.s32.f32 %v184
    %v187 = vadd.f32 %v179, %v185
    %v188 = vadd.f32 %v180, %v186
    %v189 = vadd.s32 %v157, 32
    %v190 = vadd.s32 %v158, 32
    %191 = vset.pattern.permute.xlu0 1
    %192 = vperm.xlu0 %191, %v189
    %v193 = vpop.permute.xlu0 %192
    %194 = vset.pattern.permute.xlu0 1
    %195 = vperm.xlu0 %194, %v190
    %v196 = vpop.permute.xlu0 %195
    %vm197 = vcmp.eq.s32.totalorder %v193, %v47
    %vm198 = vcmp.eq.s32.totalorder %v196, %v47
    %v199 = vsel %vm197, 1, 0
    %v200 = vsel %vm198, 1, 0
    %v201 = vcvt.s32.f32 %v199
    %v202 = vcvt.s32.f32 %v200
    %v203 = vadd.f32 %v187, %v201
    %v204 = vadd.f32 %v188, %v202
    %205 = vset.pattern.permute.xlu0 2
    %206 = vperm.xlu0 %205, %v189
    %v207 = vpop.permute.xlu0 %206
    %208 = vset.pattern.permute.xlu0 2
    %209 = vperm.xlu0 %208, %v190
    %v210 = vpop.permute.xlu0 %209
    %vm211 = vcmp.eq.s32.totalorder %v207, %v47
    %vm212 = vcmp.eq.s32.totalorder %v210, %v47
    %v213 = vsel %vm211, 1, 0
    %v214 = vsel %vm212, 1, 0
    %v215 = vcvt.s32.f32 %v213
    %v216 = vcvt.s32.f32 %v214
    %v217 = vadd.f32 %v203, %v215
    %v218 = vadd.f32 %v204, %v216
    %219 = vset.pattern.permute.xlu0 3
    %220 = vperm.xlu0 %219, %v189
    %v221 = vpop.permute.xlu0 %220
    %222 = vset.pattern.permute.xlu0 3
    %223 = vperm.xlu0 %222, %v190
    %v224 = vpop.permute.xlu0 %223
    %vm225 = vcmp.eq.s32.totalorder %v221, %v47
    %vm226 = vcmp.eq.s32.totalorder %v224, %v47
    %v227 = vsel %vm225, 1, 0
    %v228 = vsel %vm226, 1, 0
    %v229 = vcvt.s32.f32 %v227
    %v230 = vcvt.s32.f32 %v228
    %v231 = vadd.f32 %v217, %v229
    %v232 = vadd.f32 %v218, %v230
    %233 = vset.pattern.permute.xlu0 4
    %234 = vperm.xlu0 %233, %v189
    %v235 = vpop.permute.xlu0 %234
    %236 = vset.pattern.permute.xlu0 4
    %237 = vperm.xlu0 %236, %v190
    %v238 = vpop.permute.xlu0 %237
    %vm239 = vcmp.eq.s32.totalorder %v235, %v47
    %vm240 = vcmp.eq.s32.totalorder %v238, %v47
    %v241 = vsel %vm239, 1, 0
    %v242 = vsel %vm240, 1, 0
    %v243 = vcvt.s32.f32 %v241
    %v244 = vcvt.s32.f32 %v242
    %v245 = vadd.f32 %v231, %v243
    %v246 = vadd.f32 %v232, %v244
    %247 = vset.pattern.permute.xlu0 5
    %248 = vperm.xlu0 %247, %v189
    %v249 = vpop.permute.xlu0 %248
    %250 = vset.pattern.permute.xlu0 5
    %251 = vperm.xlu0 %250, %v190
    %v252 = vpop.permute.xlu0 %251
    %vm253 = vcmp.eq.s32.totalorder %v249, %v47
    %vm254 = vcmp.eq.s32.totalorder %v252, %v47
    %v255 = vsel %vm253, 1, 0
    %v256 = vsel %vm254, 1, 0
    %v257 = vcvt.s32.f32 %v255
    %v258 = vcvt.s32.f32 %v256
    %v259 = vadd.f32 %v245, %v257
    %v260 = vadd.f32 %v246, %v258
    %261 = vset.pattern.permute.xlu0 6
    %262 = vperm.xlu0 %261, %v189
    %v263 = vpop.permute.xlu0 %262
    %264 = vset.pattern.permute.xlu0 6
    %265 = vperm.xlu0 %264, %v190
    %v266 = vpop.permute.xlu0 %265
    %vm267 = vcmp.eq.s32.totalorder %v263, %v47
    %vm268 = vcmp.eq.s32.totalorder %v266, %v47
    %v269 = vsel %vm267, 1, 0
    %v270 = vsel %vm268, 1, 0
    %v271 = vcvt.s32.f32 %v269
    %v272 = vcvt.s32.f32 %v270
    %v273 = vadd.f32 %v259, %v271
    %v274 = vadd.f32 %v260, %v272
    %275 = vset.pattern.permute.xlu0 7
    %276 = vperm.xlu0 %275, %v189
    %v277 = vpop.permute.xlu0 %276
    %278 = vset.pattern.permute.xlu0 7
    %279 = vperm.xlu0 %278, %v190
    %v280 = vpop.permute.xlu0 %279
    %vm281 = vcmp.eq.s32.totalorder %v277, %v47
    %vm282 = vcmp.eq.s32.totalorder %v280, %v47
    %v283 = vsel %vm281, 1, 0
    %v284 = vsel %vm282, 1, 0
    %v285 = vcvt.s32.f32 %v283
    %v286 = vcvt.s32.f32 %v284
    %v287 = vadd.f32 %v273, %v285
    %v288 = vadd.f32 %v274, %v286
    %289 = vset.pattern.permute.xlu0 8
    %290 = vperm.xlu0 %289, %v189
    %v291 = vpop.permute.xlu0 %290
    %292 = vset.pattern.permute.xlu0 8
    %293 = vperm.xlu0 %292, %v190
    %v294 = vpop.permute.xlu0 %293
    %vm295 = vcmp.eq.s32.totalorder %v291, %v47
    %vm296 = vcmp.eq.s32.totalorder %v294, %v47
    %v297 = vsel %vm295, 1, 0
    %v298 = vsel %vm296, 1, 0
    %v299 = vcvt.s32.f32 %v297
    %v300 = vcvt.s32.f32 %v298
    %v301 = vadd.f32 %v287, %v299
    %v302 = vadd.f32 %v288, %v300
    %303 = vset.pattern.permute.xlu0 9
    %304 = vperm.xlu0 %303, %v189
    %v305 = vpop.permute.xlu0 %304
    %306 = vset.pattern.permute.xlu0 9
    %307 = vperm.xlu0 %306, %v190
    %v308 = vpop.permute.xlu0 %307
    %vm309 = vcmp.eq.s32.totalorder %v305, %v47
    %vm310 = vcmp.eq.s32.totalorder %v308, %v47
    %v311 = vsel %vm309, 1, 0
    %v312 = vsel %vm310, 1, 0
    %v313 = vcvt.s32.f32 %v311
    %v314 = vcvt.s32.f32 %v312
    %v315 = vadd.f32 %v301, %v313
    %v316 = vadd.f32 %v302, %v314
    %317 = vset.pattern.permute.xlu0 10
    %318 = vperm.xlu0 %317, %v189
    %v319 = vpop.permute.xlu0 %318
    %320 = vset.pattern.permute.xlu0 10
    %321 = vperm.xlu0 %320, %v190
    %v322 = vpop.permute.xlu0 %321
    %vm323 = vcmp.eq.s32.totalorder %v319, %v47
    %vm324 = vcmp.eq.s32.totalorder %v322, %v47
    %v325 = vsel %vm323, 1, 0
    %v326 = vsel %vm324, 1, 0
    %v327 = vcvt.s32.f32 %v325
    %v328 = vcvt.s32.f32 %v326
    %v329 = vadd.f32 %v315, %v327
    %v330 = vadd.f32 %v316, %v328
    %331 = vset.pattern.permute.xlu0 11
    %332 = vperm.xlu0 %331, %v189
    %v333 = vpop.permute.xlu0 %332
    %334 = vset.pattern.permute.xlu0 11
    %335 = vperm.xlu0 %334, %v190
    %v336 = vpop.permute.xlu0 %335
    %vm337 = vcmp.eq.s32.totalorder %v333, %v47
    %vm338 = vcmp.eq.s32.totalorder %v336, %v47
    %v339 = vsel %vm337, 1, 0
    %v340 = vsel %vm338, 1, 0
    %v341 = vcvt.s32.f32 %v339
    %v342 = vcvt.s32.f32 %v340
    %v343 = vadd.f32 %v329, %v341
    %v344 = vadd.f32 %v330, %v342
    %345 = vset.pattern.permute.xlu0 12
    %346 = vperm.xlu0 %345, %v189
    %v347 = vpop.permute.xlu0 %346
    %348 = vset.pattern.permute.xlu0 12
    %349 = vperm.xlu0 %348, %v190
    %v350 = vpop.permute.xlu0 %349
    %vm351 = vcmp.eq.s32.totalorder %v347, %v47
    %vm352 = vcmp.eq.s32.totalorder %v350, %v47
    %v353 = vsel %vm351, 1, 0
    %v354 = vsel %vm352, 1, 0
    %v355 = vcvt.s32.f32 %v353
    %v356 = vcvt.s32.f32 %v354
    %v357 = vadd.f32 %v343, %v355
    %v358 = vadd.f32 %v344, %v356
    %359 = vset.pattern.permute.xlu0 13
    %360 = vperm.xlu0 %359, %v189
    %v361 = vpop.permute.xlu0 %360
    %362 = vset.pattern.permute.xlu0 13
    %363 = vperm.xlu0 %362, %v190
    %v364 = vpop.permute.xlu0 %363
    %vm365 = vcmp.eq.s32.totalorder %v361, %v47
    %vm366 = vcmp.eq.s32.totalorder %v364, %v47
    %v367 = vsel %vm365, 1, 0
    %v368 = vsel %vm366, 1, 0
    %v369 = vcvt.s32.f32 %v367
    %v370 = vcvt.s32.f32 %v368
    %v371 = vadd.f32 %v357, %v369
    %v372 = vadd.f32 %v358, %v370
    %373 = vset.pattern.permute.xlu0 14
    %374 = vperm.xlu0 %373, %v189
    %v375 = vpop.permute.xlu0 %374
    %376 = vset.pattern.permute.xlu0 14
    %377 = vperm.xlu0 %376, %v190
    %v378 = vpop.permute.xlu0 %377
    %vm379 = vcmp.eq.s32.totalorder %v375, %v47
    %vm380 = vcmp.eq.s32.totalorder %v378, %v47
    %v381 = vsel %vm379, 1, 0
    %v382 = vsel %vm380, 1, 0
    %v383 = vcvt.s32.f32 %v381
    %v384 = vcvt.s32.f32 %v382
    %v385 = vadd.f32 %v371, %v383
    %v386 = vadd.f32 %v372, %v384
    %v387 = vld [vmem:[#allocation5] sm:$0xff]
    %v388 = vld [vmem:[#allocation5 + $0x8] sm:$0xff]
    %v389 = vld [vmem:[#allocation5 + $0x10] sm:$0xff]
    %v390 = vld [vmem:[#allocation5 + $0x18] sm:$0xff]
    %v391 = vld [vmem:[#allocation5 + $0x20] sm:$0xff]
    %v392 = vld [vmem:[#allocation5 + $0x28] sm:$0xff]
    %v393 = vld [vmem:[#allocation5 + $0x30] sm:$0xff]
    %v394 = vld [vmem:[#allocation5 + $0x38] sm:$0xff]
    %v395 = vld [vmem:[#allocation5 + $0x40] sm:$0xff]
    %v396 = vld [vmem:[#allocation5 + $0x48] sm:$0xff]
    %v397 = vld [vmem:[#allocation5 + $0x50] sm:$0xff]
    %v398 = vld [vmem:[#allocation5 + $0x58] sm:$0xff]
    %v399 = vld [vmem:[#allocation5 + $0x60] sm:$0xff]
    %v400 = vld [vmem:[#allocation5 + $0x68] sm:$0xff]
    %v401 = vld [vmem:[#allocation5 + $0x70] sm:$0xff]
    %v402 = vld [vmem:[#allocation5 + $0x78] sm:$0xff]
    %403 = vmatpush.msra.mxu0 %v402
    %404 = vmatpush.msra.mxu0 %v401
    %405 = vmatpush.msra.mxu0 %v400
    %406 = vmatpush.msra.mxu0 %v399
    %407 = vmatpush.msra.mxu0 %v398
    %408 = vmatpush.msra.mxu0 %v397
    %409 = vmatpush.msra.mxu0 %v396
    %410 = vmatpush.msra.mxu0 %v395
    %411 = vmatpush.msra.mxu0 %v394
    %412 = vmatpush.msra.mxu0 %v393
    %413 = vmatpush.msra.mxu0 %v392
    %414 = vmatpush.msra.mxu0 %v391
    %415 = vmatpush.msra.mxu0 %v390
    %416 = vmatpush.msra.mxu0 %v389
    %417 = vmatpush.msra.mxu0 %v388
    %418 = vmatpush.msra.mxu0 %v387
    %419 = vmatmul.f32.gmra.mxu0 %v385
    %v420 = vpop.f32.mrf.mxu0
    %v421 = vadd.f32 0.0, %v420
    %422 = vmatmul.f32.gmra.mxu0 %v386
    %v423 = vpop.f32.mrf.mxu0
    %v424 = vadd.f32 0.0, %v423
    %425 = vdwg.mxu0
    %426 = vst [vmem:[#allocation7] sm:$0xff] %v421
    %427 = vst [vmem:[#allocation7 + $0x8] sm:$0xff] %v424
    // Predicated region
    $region18: #{tpu_custom_call.1} parent=1 // pred_check
      _
    $region19: #{tpu_custom_call.1} parent=1 // pred_check_branch
      %429 = sbr.rel (0) target = $region21
    $region20: #{tpu_custom_call.1} parent=1 // pred_region
      %431 = vsyncadd [#allocation4], 0
      %s432 = sshll.u32 [#allocation7], 4
      %s433 = int_to_ptr.vmem [resolvable:$true] %s432
      %s434 = sshll.u32 %s2, 4
      %s435 = int_to_ptr.hbm [resolvable:$true] %s434
      %440 = dma.vmem_to_hbm [thread:$0]  %s433, 256, %s435, [#allocation4], 128, 128, 8
    $region21: #{tpu_custom_call.1} parent=1 // pred_fallthru
      _
    // Predicated region
    $region22: #{tpu_custom_call.1} parent=1 // pred_check
      _
    $region23: #{tpu_custom_call.1} parent=1 // pred_check_branch
      %442 = sbr.rel (0) target = $region25
    $region24: #{tpu_custom_call.1} parent=1 // pred_region
      %444 = dma.done [#allocation4], 256
    $region25: #{tpu_custom_call.1} parent=1 // pred_fallthru
      _
    %445 = vsyncpa [#allocation3], 1
    %446 = vsyncpa [#allocation6], 1
    %447 = vsyncpa [#allocation4], 1

</llo_original>
